<compile_context>
chip_gen: v5e
topology: v5e:2x2
jax: 0.10.0
libtpu: 0.0.40
codegen_flags: <defaults>
</compile_context>

<pallas_src>
import functools

import jax
import jax.numpy as jnp
import numpy as np
from jax.experimental import pallas as pl
from jax.experimental.pallas import tpu as pltpu


def _basic_block_kernel(x_ref, w1_ref, s1_ref, b1_ref, w2_ref, s2_ref, b2_ref,
                        out_ref, pad_ref, *, H, W, C, P):
    """One image per grid step; (W, channels) packed onto the lane axis.

    x_ref   : (H, W*C)           bf16  lane-packed input (also the residual)
    w*_ref  : (3, (W+2)*C, W*P)  bf16  banded conv-as-matmul weights (slice kh)
    s*, b*  : (1, W*P)           f32   folded BN scale / bias (tiled over w)
    out_ref : (H, W*P)           f32   lane-packed output (128-lane-wide stores)
    pad_ref : (H+2, (W+2)*C)     bf16  VMEM scratch holding the padded activation
    """
    WC = W * C
    WPC = (W + 2) * C

    # Zero only the padding halo; the interior is fully overwritten below.
    # Re-done every grid step so correctness holds when the batch axis is
    # sharded across TensorCores (each core has its own scratch).
    zrow = jnp.zeros((1, WPC), pad_ref.dtype)
    zcol = jnp.zeros((H, C), pad_ref.dtype)
    pad_ref[0:1, :] = zrow
    pad_ref[H + 1:H + 2, :] = zrow
    pad_ref[1:H + 1, 0:C] = zcol
    pad_ref[1:H + 1, (W + 1) * C:(W + 2) * C] = zcol

    def conv3x3(w_ref):
        # 3x3 "same" conv over the lane-packed layout = 3 MXU matmuls (one per
        # kernel row kh).  The kw shift and the channel contraction live inside
        # the banded weight, so there is no per-tap slicing / im2col copy and
        # the result comes out already lane-packed as (H, W*P).
        acc = jnp.dot(pad_ref[0:H, :], w_ref[0],
                      preferred_element_type=jnp.float32)
        acc = acc + jnp.dot(pad_ref[1:H + 1, :], w_ref[1],
                            preferred_element_type=jnp.float32)
        acc = acc + jnp.dot(pad_ref[2:H + 2, :], w_ref[2],
                            preferred_element_type=jnp.float32)
        return acc                                            # (H, W*P) f32

    x = x_ref[...]                                            # bf16 (H, W*C)

    # ---- conv1 -> BN1 (folded) -> ReLU ----
    pad_ref[1:H + 1, C:C + WC] = x
    out1 = jnp.maximum(conv3x3(w1_ref) * s1_ref[...] + b1_ref[...], 0.0)

    # ---- conv2 -> BN2 (folded) -> + residual -> ReLU ----
    pad_ref[1:H + 1, C:C + WC] = out1.astype(pad_ref.dtype)
    out2 = conv3x3(w2_ref) * s2_ref[...] + b2_ref[...]
    out_ref[...] = jnp.maximum(out2 + x.astype(jnp.float32), 0.0)


def _banded_conv_weight(w_oihw, W):
    """(P, C, 3, 3) conv weight -> (3, (W+2)*C, W*P) banded matmul weight.

    R[kh, (w+kw)*C + c, w*P + p] = w_oihw[p, c, kh, kw] and zero elsewhere, so
    that   out[h, w*P + p] = sum_kh  xpad_packed[h+kh, :] @ R[kh]
    reproduces a 3x3 padding=1 convolution on the (W, C)-lane-packed layout.
    """
    P, C, _, _ = w_oihw.shape
    wt = jnp.transpose(w_oihw, (2, 3, 1, 0)).astype(jnp.float32)   # (kh,kw,c,p)
    kw = np.arange(3)[:, None, None]
    col = np.arange(W + 2)[None, :, None]
    wpos = np.arange(W)[None, None, :]
    sel = jnp.asarray((col == wpos + kw).astype(np.float32))       # (3, W+2, W)
    band = jnp.einsum('kxw,hkcp->hxcwp', sel, wt)                  # (3,W+2,C,W,P)
    return band.reshape(3, (W + 2) * C, W * P).astype(jnp.bfloat16)


def basic_block_pallas(x_nchw, w1, g1, be1, rm1, rv1, w2, g2, be2, rm2, rv2,
                       eps=1e-5):
    """x_nchw: (N, C, H, W).  Conv weights w1/w2: (P, C, 3, 3) PyTorch layout."""
    N, C, H, W = x_nchw.shape
    P = w1.shape[0]
    assert C == P, "stride=1 / downsample=None BasicBlock requires inplanes == planes"

    # NCHW -> (N, H, W*C): pack (W, C) onto the lane axis; bf16 MXU input.
    x_packed = (jnp.transpose(x_nchw, (0, 2, 3, 1))
                .reshape(N, H, W * C).astype(jnp.bfloat16))

    # Banded conv-as-matmul weights (bf16 MXU operands).
    w1_b = _banded_conv_weight(w1, W)
    w2_b = _banded_conv_weight(w2, W)

    # Fold BN (inference mode, running stats) into scale/bias, tiled to (1, W*P).
    def fold(g, be, rm, rv):
        inv = 1.0 / jnp.sqrt(rv.astype(jnp.float32) + eps)
        s = (g * inv).astype(jnp.float32)
        b = (be - rm * g * inv).astype(jnp.float32)
        return (jnp.tile(s.reshape(1, P), (1, W)),
                jnp.tile(b.reshape(1, P), (1, W)))

    s1, b1 = fold(g1, be1, rm1, rv1)
    s2, b2 = fold(g2, be2, rm2, rv2)

    kernel = functools.partial(_basic_block_kernel, H=H, W=W, C=C, P=P)

    out_packed = pl.pallas_call(
        kernel,
        out_shape=jax.ShapeDtypeStruct((N, H, W * P), jnp.float32),
        grid_spec=pltpu.PrefetchScalarGridSpec(
            num_scalar_prefetch=0,
            grid=(N,),
            in_specs=[
                pl.BlockSpec((None, H, W * C), lambda n: (n, 0, 0)),
                pl.BlockSpec((3, (W + 2) * C, W * P), lambda n: (0, 0, 0)),
                pl.BlockSpec((1, W * P), lambda n: (0, 0)),
                pl.BlockSpec((1, W * P), lambda n: (0, 0)),
                pl.BlockSpec((3, (W + 2) * C, W * P), lambda n: (0, 0, 0)),
                pl.BlockSpec((1, W * P), lambda n: (0, 0)),
                pl.BlockSpec((1, W * P), lambda n: (0, 0)),
            ],
            out_specs=pl.BlockSpec((None, H, W * P), lambda n: (n, 0, 0)),
            scratch_shapes=[pltpu.VMEM((H + 2, (W + 2) * C), jnp.bfloat16)],
        ),
        compiler_params=pltpu.CompilerParams(
            dimension_semantics=("parallel",),       # megacore split on v7x
            vmem_limit_bytes=32 * 1024 * 1024,
        ),
    )(x_packed, w1_b, s1, b1, w2_b, s2, b2)

    # (N, H, W*P) -> (N, H, W, P) -> NCHW (layout plumbing done in XLA).
    return jnp.transpose(out_packed.reshape(N, H, W, P), (0, 3, 1, 2))


def _reference(x, w1, g1, be1, rm1, rv1, w2, g2, be2, rm2, rv2,
               eps=1e-5, quantize_inputs=False):
    """Pure-JAX BasicBlock.forward reference (BN in eval mode).

    quantize_inputs=True rounds every conv/matmul operand (and the residual) to
    bf16 and back, exactly mimicking the kernel's MXU inputs while keeping f32
    accumulation and f32 BN/ReLU — giving a tight comparison target.
    """
    if quantize_inputs:
        q = lambda a: a.astype(jnp.bfloat16).astype(jnp.float32)
    else:
        q = lambda a: a

    def conv3x3(a, w):
        return jax.lax.conv_general_dilated(
            q(a), q(w), window_strides=(1, 1), padding=((1, 1), (1, 1)),
            dimension_numbers=("NCHW", "OIHW", "NCHW"),
            precision=jax.lax.Precision.HIGHEST)

    def bn(a, g, b, rm, rv):
        g = g.reshape(1, -1, 1, 1); b = b.reshape(1, -1, 1, 1)
        rm = rm.reshape(1, -1, 1, 1); rv = rv.reshape(1, -1, 1, 1)
        return (a - rm) / jnp.sqrt(rv + eps) * g + b

    out = jax.nn.relu(bn(conv3x3(x, w1), g1, be1, rm1, rv1))
    out = bn(conv3x3(out, w2), g2, be2, rm2, rv2)
    return jax.nn.relu(out + q(x))


if __name__ == "__main__":
    N, C, H, W = 2, 8, 16, 16          # inplanes = planes = 8 -> identity residual
    key = jax.random.PRNGKey(0)
    ks = jax.random.split(key, 3)

    x = jax.random.normal(ks[0], (N, C, H, W), jnp.float32)
    w1 = 0.1 * jax.random.normal(ks[1], (C, C, 3, 3), jnp.float32)
    w2 = 0.1 * jax.random.normal(ks[2], (C, C, 3, 3), jnp.float32)

    # Deterministic BN parameters / running stats (nn.BatchNorm2d, eval mode).
    g1 = 1.0 + 0.1 * jnp.arange(C, dtype=jnp.float32)
    be1 = 0.05 * jnp.arange(C, dtype=jnp.float32)
    rm1 = 0.02 * jnp.arange(C, dtype=jnp.float32) - 0.05
    rv1 = 1.0 + 0.03 * jnp.arange(C, dtype=jnp.float32)
    g2 = 1.0 - 0.02 * jnp.arange(C, dtype=jnp.float32)
    be2 = -0.03 * jnp.arange(C, dtype=jnp.float32)
    rm2 = 0.01 * jnp.arange(C, dtype=jnp.float32)
    rv2 = 0.9 + 0.05 * jnp.arange(C, dtype=jnp.float32)

    out = basic_block_pallas(x, w1, g1, be1, rm1, rv1, w2, g2, be2, rm2, rv2)
    out = jax.block_until_ready(out)
    assert out.shape == (N, C, H, W)

    # Tight check vs. a reference that quantizes matmul operands to bf16 exactly
    # like the kernel (f32 accumulation / BN / residual / ReLU in both).
    ref_q = _reference(x, w1, g1, be1, rm1, rv1, w2, g2, be2, rm2, rv2,
                       quantize_inputs=True)
    assert jnp.allclose(out, ref_q, atol=5e-3, rtol=5e-3), \
        "mismatch vs bf16-operand reference"

    # Looser sanity check vs. the pure-f32 reference (bf16 MXU inputs).
    ref_f = _reference(x, w1, g1, be1, rm1, rv1, w2, g2, be2, rm2, rv2,
                       quantize_inputs=False)
    assert jnp.allclose(out, ref_f, atol=1e-1, rtol=1e-1), \
        "mismatch vs f32 reference"

    print("KERNEL_OK")
</pallas_src>

<mosaic_0001>
module attributes {stable_mosaic.version = 11 : i64} {
  func.func @_basic_block_kernel(%arg0: i32, %arg1: memref<1x16x128xbf16, #tpu.memory_space<vmem>>, %arg2: memref<3x144x128xbf16, #tpu.memory_space<vmem>>, %arg3: memref<1x128xf32, #tpu.memory_space<vmem>>, %arg4: memref<1x128xf32, #tpu.memory_space<vmem>>, %arg5: memref<3x144x128xbf16, #tpu.memory_space<vmem>>, %arg6: memref<1x128xf32, #tpu.memory_space<vmem>>, %arg7: memref<1x128xf32, #tpu.memory_space<vmem>>, %arg8: memref<1x16x128xf32, #tpu.memory_space<vmem>>, %arg9: memref<18x144xbf16, #tpu.memory_space<vmem>>) attributes {dimension_semantics = [#tpu.dimension_semantics<parallel>], iteration_bounds = array<i64: 2>, scalar_prefetch = 0 : i64, scratch_operands = 1 : i64, tpu.core_type = #tpu.core_type<tc>, window_params = [{transform_indices = @transform_0, window_bounds = array<i64: 1, 16, 128>}, {pipeline_mode = #tpu.pipeline_mode<synchronous>, transform_indices = @transform_1, window_bounds = array<i64: 3, 144, 128>}, {pipeline_mode = #tpu.pipeline_mode<synchronous>, transform_indices = @transform_2, window_bounds = array<i64: 1, 128>}, {pipeline_mode = #tpu.pipeline_mode<synchronous>, transform_indices = @transform_3, window_bounds = array<i64: 1, 128>}, {pipeline_mode = #tpu.pipeline_mode<synchronous>, transform_indices = @transform_4, window_bounds = array<i64: 3, 144, 128>}, {pipeline_mode = #tpu.pipeline_mode<synchronous>, transform_indices = @transform_5, window_bounds = array<i64: 1, 128>}, {pipeline_mode = #tpu.pipeline_mode<synchronous>, transform_indices = @transform_6, window_bounds = array<i64: 1, 128>}, {transform_indices = @transform_7, window_bounds = array<i64: 1, 16, 128>}]} {
    %cst = arith.constant 0.000000e+00 : bf16
    %0 = vector.broadcast %cst : bf16 to vector<1x144xbf16>
    %cst_0 = arith.constant 0.000000e+00 : bf16
    %1 = vector.broadcast %cst_0 : bf16 to vector<16x8xbf16>
    %c0 = arith.constant 0 : index
    %c0_1 = arith.constant 0 : index
    %2 = vector.load %arg9[%c0, %c0_1] : memref<18x144xbf16, #tpu.memory_space<vmem>>, vector<1x144xbf16>
    tpu.vector_store %arg9[%c0, %c0_1], %0 {strides = array<i32>} : memref<18x144xbf16, #tpu.memory_space<vmem>>, vector<1x144xbf16>,
    %c17 = arith.constant 17 : index
    %c0_2 = arith.constant 0 : index
    %3 = vector.load %arg9[%c17, %c0_2] : memref<18x144xbf16, #tpu.memory_space<vmem>>, vector<1x144xbf16>
    tpu.vector_store %arg9[%c17, %c0_2], %0 {strides = array<i32>} : memref<18x144xbf16, #tpu.memory_space<vmem>>, vector<1x144xbf16>,
    %c1 = arith.constant 1 : index
    %c0_3 = arith.constant 0 : index
    %4 = vector.load %arg9[%c1, %c0_3] : memref<18x144xbf16, #tpu.memory_space<vmem>>, vector<16x8xbf16>
    tpu.vector_store %arg9[%c1, %c0_3], %1 {strides = array<i32>} : memref<18x144xbf16, #tpu.memory_space<vmem>>, vector<16x8xbf16>,
    %c1_4 = arith.constant 1 : index
    %c136 = arith.constant 136 : index
    %5 = vector.load %arg9[%c1_4, %c136] : memref<18x144xbf16, #tpu.memory_space<vmem>>, vector<16x8xbf16>
    tpu.vector_store %arg9[%c1_4, %c136], %1 {strides = array<i32>} : memref<18x144xbf16, #tpu.memory_space<vmem>>, vector<16x8xbf16>,
    %c0_5 = arith.constant 0 : index
    %c0_6 = arith.constant 0 : index
    %c0_7 = arith.constant 0 : index
    %6 = vector.load %arg1[%c0_5, %c0_6, %c0_7] : memref<1x16x128xbf16, #tpu.memory_space<vmem>>, vector<1x16x128xbf16>
    %7 = vector.shape_cast %6 : vector<1x16x128xbf16> to vector<16x128xbf16>
    %c1_8 = arith.constant 1 : index
    %c8 = arith.constant 8 : index
    %8 = vector.load %arg9[%c1_8, %c8] : memref<18x144xbf16, #tpu.memory_space<vmem>>, vector<16x128xbf16>
    tpu.vector_store %arg9[%c1_8, %c8], %7 {strides = array<i32>} : memref<18x144xbf16, #tpu.memory_space<vmem>>, vector<16x128xbf16>,
    %c0_9 = arith.constant 0 : index
    %c0_10 = arith.constant 0 : index
    %9 = vector.load %arg9[%c0_9, %c0_10] : memref<18x144xbf16, #tpu.memory_space<vmem>>, vector<16x144xbf16>
    %c0_11 = arith.constant 0 : index
    %c0_12 = arith.constant 0 : index
    %c0_13 = arith.constant 0 : index
    %10 = vector.load %arg2[%c0_11, %c0_12, %c0_13] : memref<3x144x128xbf16, #tpu.memory_space<vmem>>, vector<1x144x128xbf16>
    %11 = vector.shape_cast %10 : vector<1x144x128xbf16> to vector<144x128xbf16>
    %cst_14 = arith.constant dense<0.000000e+00> : vector<16x128xf32>
    %12 = tpu.matmul %9, %11, %cst_14 {dimension_numbers = #tpu.dot_dimension_numbers<[1], [0], [0], [1], [0, 0, 1, 1], [], []>} : vector<16x144xbf16>, vector<144x128xbf16>, vector<16x128xf32> -> vector<16x128xf32>
    %c1_15 = arith.constant 1 : index
    %c0_16 = arith.constant 0 : index
    %13 = vector.load %arg9[%c1_15, %c0_16] : memref<18x144xbf16, #tpu.memory_space<vmem>>, vector<16x144xbf16>
    %c1_17 = arith.constant 1 : index
    %c0_18 = arith.constant 0 : index
    %c0_19 = arith.constant 0 : index
    %14 = vector.load %arg2[%c1_17, %c0_18, %c0_19] : memref<3x144x128xbf16, #tpu.memory_space<vmem>>, vector<1x144x128xbf16>
    %15 = vector.shape_cast %14 : vector<1x144x128xbf16> to vector<144x128xbf16>
    %cst_20 = arith.constant dense<0.000000e+00> : vector<16x128xf32>
    %16 = tpu.matmul %13, %15, %cst_20 {dimension_numbers = #tpu.dot_dimension_numbers<[1], [0], [0], [1], [0, 0, 1, 1], [], []>} : vector<16x144xbf16>, vector<144x128xbf16>, vector<16x128xf32> -> vector<16x128xf32>
    %17 = arith.addf %12, %16 : vector<16x128xf32>
    %c2 = arith.constant 2 : index
    %c0_21 = arith.constant 0 : index
    %18 = vector.load %arg9[%c2, %c0_21] : memref<18x144xbf16, #tpu.memory_space<vmem>>, vector<16x144xbf16>
    %c2_22 = arith.constant 2 : index
    %c0_23 = arith.constant 0 : index
    %c0_24 = arith.constant 0 : index
    %19 = vector.load %arg2[%c2_22, %c0_23, %c0_24] : memref<3x144x128xbf16, #tpu.memory_space<vmem>>, vector<1x144x128xbf16>
    %20 = vector.shape_cast %19 : vector<1x144x128xbf16> to vector<144x128xbf16>
    %cst_25 = arith.constant dense<0.000000e+00> : vector<16x128xf32>
    %21 = tpu.matmul %18, %20, %cst_25 {dimension_numbers = #tpu.dot_dimension_numbers<[1], [0], [0], [1], [0, 0, 1, 1], [], []>} : vector<16x144xbf16>, vector<144x128xbf16>, vector<16x128xf32> -> vector<16x128xf32>
    %22 = arith.addf %17, %21 : vector<16x128xf32>
    %c0_26 = arith.constant 0 : index
    %c0_27 = arith.constant 0 : index
    %23 = vector.load %arg3[%c0_26, %c0_27] : memref<1x128xf32, #tpu.memory_space<vmem>>, vector<1x128xf32>
    %24 = vector.broadcast %23 : vector<1x128xf32> to vector<16x128xf32>
    %25 = arith.mulf %22, %24 : vector<16x128xf32>
    %c0_28 = arith.constant 0 : index
    %c0_29 = arith.constant 0 : index
    %26 = vector.load %arg4[%c0_28, %c0_29] : memref<1x128xf32, #tpu.memory_space<vmem>>, vector<1x128xf32>
    %27 = vector.broadcast %26 : vector<1x128xf32> to vector<16x128xf32>
    %28 = arith.addf %25, %27 : vector<16x128xf32>
    %cst_30 = arith.constant 0.000000e+00 : f32
    %29 = vector.broadcast %cst_30 : f32 to vector<16x128xf32>
    %30 = arith.maximumf %28, %29 : vector<16x128xf32>
    %31 = arith.truncf %30 : vector<16x128xf32> to vector<16x128xbf16>
    %c1_31 = arith.constant 1 : index
    %c8_32 = arith.constant 8 : index
    %32 = vector.load %arg9[%c1_31, %c8_32] : memref<18x144xbf16, #tpu.memory_space<vmem>>, vector<16x128xbf16>
    tpu.vector_store %arg9[%c1_31, %c8_32], %31 {strides = array<i32>} : memref<18x144xbf16, #tpu.memory_space<vmem>>, vector<16x128xbf16>,
    %c0_33 = arith.constant 0 : index
    %c0_34 = arith.constant 0 : index
    %33 = vector.load %arg9[%c0_33, %c0_34] : memref<18x144xbf16, #tpu.memory_space<vmem>>, vector<16x144xbf16>
    %c0_35 = arith.constant 0 : index
    %c0_36 = arith.constant 0 : index
    %c0_37 = arith.constant 0 : index
    %34 = vector.load %arg5[%c0_35, %c0_36, %c0_37] : memref<3x144x128xbf16, #tpu.memory_space<vmem>>, vector<1x144x128xbf16>
    %35 = vector.shape_cast %34 : vector<1x144x128xbf16> to vector<144x128xbf16>
    %cst_38 = arith.constant dense<0.000000e+00> : vector<16x128xf32>
    %36 = tpu.matmul %33, %35, %cst_38 {dimension_numbers = #tpu.dot_dimension_numbers<[1], [0], [0], [1], [0, 0, 1, 1], [], []>} : vector<16x144xbf16>, vector<144x128xbf16>, vector<16x128xf32> -> vector<16x128xf32>
    %c1_39 = arith.constant 1 : index
    %c0_40 = arith.constant 0 : index
    %37 = vector.load %arg9[%c1_39, %c0_40] : memref<18x144xbf16, #tpu.memory_space<vmem>>, vector<16x144xbf16>
    %c1_41 = arith.constant 1 : index
    %c0_42 = arith.constant 0 : index
    %c0_43 = arith.constant 0 : index
    %38 = vector.load %arg5[%c1_41, %c0_42, %c0_43] : memref<3x144x128xbf16, #tpu.memory_space<vmem>>, vector<1x144x128xbf16>
    %39 = vector.shape_cast %38 : vector<1x144x128xbf16> to vector<144x128xbf16>
    %cst_44 = arith.constant dense<0.000000e+00> : vector<16x128xf32>
    %40 = tpu.matmul %37, %39, %cst_44 {dimension_numbers = #tpu.dot_dimension_numbers<[1], [0], [0], [1], [0, 0, 1, 1], [], []>} : vector<16x144xbf16>, vector<144x128xbf16>, vector<16x128xf32> -> vector<16x128xf32>
    %41 = arith.addf %36, %40 : vector<16x128xf32>
    %c2_45 = arith.constant 2 : index
    %c0_46 = arith.constant 0 : index
    %42 = vector.load %arg9[%c2_45, %c0_46] : memref<18x144xbf16, #tpu.memory_space<vmem>>, vector<16x144xbf16>
    %c2_47 = arith.constant 2 : index
    %c0_48 = arith.constant 0 : index
    %c0_49 = arith.constant 0 : index
    %43 = vector.load %arg5[%c2_47, %c0_48, %c0_49] : memref<3x144x128xbf16, #tpu.memory_space<vmem>>, vector<1x144x128xbf16>
    %44 = vector.shape_cast %43 : vector<1x144x128xbf16> to vector<144x128xbf16>
    %cst_50 = arith.constant dense<0.000000e+00> : vector<16x128xf32>
    %45 = tpu.matmul %42, %44, %cst_50 {dimension_numbers = #tpu.dot_dimension_numbers<[1], [0], [0], [1], [0, 0, 1, 1], [], []>} : vector<16x144xbf16>, vector<144x128xbf16>, vector<16x128xf32> -> vector<16x128xf32>
    %46 = arith.addf %41, %45 : vector<16x128xf32>
    %c0_51 = arith.constant 0 : index
    %c0_52 = arith.constant 0 : index
    %47 = vector.load %arg6[%c0_51, %c0_52] : memref<1x128xf32, #tpu.memory_space<vmem>>, vector<1x128xf32>
    %48 = vector.broadcast %47 : vector<1x128xf32> to vector<16x128xf32>
    %49 = arith.mulf %46, %48 : vector<16x128xf32>
    %c0_53 = arith.constant 0 : index
    %c0_54 = arith.constant 0 : index
    %50 = vector.load %arg7[%c0_53, %c0_54] : memref<1x128xf32, #tpu.memory_space<vmem>>, vector<1x128xf32>
    %51 = vector.broadcast %50 : vector<1x128xf32> to vector<16x128xf32>
    %52 = arith.addf %49, %51 : vector<16x128xf32>
    %53 = arith.extf %7 : vector<16x128xbf16> to vector<16x128xf32>
    %54 = arith.addf %52, %53 : vector<16x128xf32>
    %cst_55 = arith.constant 0.000000e+00 : f32
    %55 = vector.broadcast %cst_55 : f32 to vector<16x128xf32>
    %56 = arith.maximumf %54, %55 : vector<16x128xf32>
    %c0_56 = arith.constant 0 : index
    %c0_57 = arith.constant 0 : index
    %c0_58 = arith.constant 0 : index
    %57 = vector.load %arg8[%c0_56, %c0_57, %c0_58] : memref<1x16x128xf32, #tpu.memory_space<vmem>>, vector<1x16x128xf32>
    %58 = vector.shape_cast %57 : vector<1x16x128xf32> to vector<16x128xf32>
    %59 = vector.shape_cast %56 : vector<16x128xf32> to vector<1x16x128xf32>
    tpu.vector_store %arg8[%c0_56, %c0_57, %c0_58], %59 {strides = array<i32>} : memref<1x16x128xf32, #tpu.memory_space<vmem>>, vector<1x16x128xf32>,
    return
  }
  func.func @transform_0(%arg0: i32) -> (i32, i32, i32) {
    %c0_i32 = arith.constant 0 : i32
    %c0_i32_0 = arith.constant 0 : i32
    %c0_i32_1 = arith.constant 0 : i32
    return %arg0, %c0_i32, %c0_i32_0 : i32, i32, i32
  }
  func.func @transform_1(%arg0: i32) -> (i32, i32, i32) {
    %c0_i32 = arith.constant 0 : i32
    %c0_i32_0 = arith.constant 0 : i32
    %c0_i32_1 = arith.constant 0 : i32
    %c0_i32_2 = arith.constant 0 : i32
    return %c0_i32, %c0_i32_0, %c0_i32_1 : i32, i32, i32
  }
  func.func @transform_2(%arg0: i32) -> (i32, i32) {
    %c0_i32 = arith.constant 0 : i32
    %c0_i32_0 = arith.constant 0 : i32
    %c0_i32_1 = arith.constant 0 : i32
    return %c0_i32, %c0_i32_0 : i32, i32
  }
  func.func @transform_3(%arg0: i32) -> (i32, i32) {
    %c0_i32 = arith.constant 0 : i32
    %c0_i32_0 = arith.constant 0 : i32
    %c0_i32_1 = arith.constant 0 : i32
    return %c0_i32, %c0_i32_0 : i32, i32
  }
  func.func @transform_4(%arg0: i32) -> (i32, i32, i32) {
    %c0_i32 = arith.constant 0 : i32
    %c0_i32_0 = arith.constant 0 : i32
    %c0_i32_1 = arith.constant 0 : i32
    %c0_i32_2 = arith.constant 0 : i32
    return %c0_i32, %c0_i32_0, %c0_i32_1 : i32, i32, i32
  }
  func.func @transform_5(%arg0: i32) -> (i32, i32) {
    %c0_i32 = arith.constant 0 : i32
    %c0_i32_0 = arith.constant 0 : i32
    %c0_i32_1 = arith.constant 0 : i32
    return %c0_i32, %c0_i32_0 : i32, i32
  }
  func.func @transform_6(%arg0: i32) -> (i32, i32) {
    %c0_i32 = arith.constant 0 : i32
    %c0_i32_0 = arith.constant 0 : i32
    %c0_i32_1 = arith.constant 0 : i32
    return %c0_i32, %c0_i32_0 : i32, i32
  }
  func.func @transform_7(%arg0: i32) -> (i32, i32, i32) {
    %c0_i32 = arith.constant 0 : i32
    %c0_i32_0 = arith.constant 0 : i32
    %c0_i32_1 = arith.constant 0 : i32
    return %arg0, %c0_i32, %c0_i32_0 : i32, i32, i32
  }
}

</mosaic_0001>

<llo_original>
// kernel: tpu_custom_call.1
$region0: #{tpu_custom_call.1}
  #allocation0 [shape = 'u32[]', space=smem, size = 0x4, offset = 0x4, fixed_abs, tag = 'smem constant byte address 0x4 - core index']
  #allocation1 [shape = 'u32[72,128]{1,0:T(1,128)}', space=vmem, size = 0x9000, scoped, tag = 'internal scratch']
  #allocation2 [shape = 'bf16[18,144]{1,0:T(8,128)(2,1)}', space=vmem, size = 0x3000, scoped, tag = 'scratch operand']
  %s0 = inlined_call_operand.hbm [shape: bf16[2,16,128], index: 0, kind: input, shape index: {}]
  %s1 = inlined_call_operand.hbm [shape: bf16[3,144,128], index: 1, kind: input, shape index: {}]
  %s2 = inlined_call_operand.vmem [shape: f32[1,128], index: 2, kind: input, shape index: {}]
  %s3 = inlined_call_operand.vmem [shape: f32[1,128], index: 3, kind: input, shape index: {}]
  %s4 = inlined_call_operand.hbm [shape: bf16[3,144,128], index: 4, kind: input, shape index: {}]
  %s5 = inlined_call_operand.vmem [shape: f32[1,128], index: 5, kind: input, shape index: {}]
  %s6 = inlined_call_operand.vmem [shape: f32[1,128], index: 6, kind: input, shape index: {}]
  %s7 = inlined_call_operand.hbm [shape: f32[2,16,128], index: 7, kind: output, shape index: {}]
  %s8 = sld [smem:[#allocation0]]
  $region73: #{tpu_custom_call.1} parent=0
    _
  %s10 = ssub.s32 1, %s8
  %s11 = scalar_select 0, %s10, %s8
  $region1: #{tpu_custom_call.1} parent=0
    #allocation3 [shape = 'u8[8192]{0}', space=vmem, size = 0x2000, scoped, tag = 'input window, operand 0']
    #allocation4 [shape = 's32[2]{0}', space=sflag, size = 0x8, scoped, tag = 'scoped memory for tpu_custom_call.1']
    #allocation5 [shape = 's32[2]{0}', space=sflag, size = 0x8, scoped, tag = 'scoped memory for tpu_custom_call.1']
    #allocation6 [shape = 'u8[110592]{0}', space=vmem, size = 0x1b000, scoped, tag = 'input window, operand 1, single buffered']
    #allocation7 [shape = 's32[1]{0}', space=sflag, size = 0x4, scoped, tag = 'scoped memory for tpu_custom_call.1']
    #allocation8 [shape = 'u8[110592]{0}', space=vmem, size = 0x1b000, scoped, tag = 'input window, operand 4, single buffered']
    #allocation9 [shape = 'u8[16384]{0}', space=vmem, size = 0x4000, scoped, tag = 'output window, operand 0']
    %12 = vsyncpa [#allocation4], 0
    %s13 = scalar_lea.sflag [#allocation4], 1
    %14 = vsyncpa %s13, 0
    %15 = vsyncpa [#allocation7], 0
    %16 = vsyncpa [#allocation5], 0
    %s17 = scalar_lea.sflag [#allocation5], 1
    %18 = vsyncpa %s17, 0
    loop: start=0, step=1, limit=4
    $region2: #{tpu_custom_call.1} parent=1 // loop_pre_header
      _
    $region3: #{tpu_custom_call.1} parent=1 // loop_header
      %s20 = sphi 0, %s24
      %p21 = scmp.ge.s32.totalorder %s20, 4
      %s30 = sphi 0, %s32
      %s33 = sphi 0, %s30
      %s34 = sphi 0, %s33
      %s50 = sphi 0, %s34
      %s54 = sphi 0, %s54
      %s56 = sphi 0, %s54
      %s57 = sphi 0, %s56
      %s71 = sphi 0, %s57
      %s75 = sphi 0, %s75
      %s77 = sphi 0, %s75
      %s78 = sphi 0, %s77
      %s92 = sphi 0, %s78
      %s96 = sphi 0, %s96
      %s98 = sphi 0, %s96
      %s99 = sphi 0, %s98
      %s113 = sphi 0, %s99
      %s117 = sphi 0, %s117
      %s119 = sphi 0, %s117
      %s120 = sphi 0, %s119
      %s134 = sphi 0, %s120
      %s138 = sphi 0, %s138
      %s140 = sphi 0, %s138
      %s141 = sphi 0, %s140
      %s155 = sphi 0, %s141
      %s159 = sphi 0, %s159
      %s161 = sphi 0, %s159
      %s162 = sphi 0, %s161
      %s176 = sphi 0, %s162
      %s182 = sphi 0, %s184
      %s185 = sphi 0, %s182
      %s186 = sphi 0, %s185
      %s202 = sphi 0, %s186
    $region4: #{tpu_custom_call.1} parent=1 // loop_header_branch
      %23 = sbr.rel (%p21) target = $region8
    $region5: #{tpu_custom_call.1} parent=1 // loop_body
      %s25 = ssub.s32 %s20, 1
      %s26 = ssub.s32 %s20, 2
      %s27 = sadd.s32 %s20, 1
      %s28 = ssub.s32 %s20, %s27
      %p29 = scmp.eq.s32.totalorder %s28, 0
      %s31 = sadd.s32 %s30, 1
      %s32 = scalar_select %p29, %s30, %s31
      %p35 = pneg %p29
      %p36 = scmp.eq.s32.totalorder %s20, 1
      %p37 = por %p35, %p36
      %p38 = scmp.ne.s32.totalorder %s30, %s33
      %p39 = scmp.eq.s32.totalorder %s20, 0
      %p40 = por %p38, %p39
      %p41 = scmp.ne.s32.totalorder %s30, %s33
      %p42 = scmp.eq.s32.totalorder %s25, 1
      %p43 = por %p41, %p42
      %p44 = scmp.ne.s32.totalorder %s33, %s34
      %p45 = scmp.eq.s32.totalorder %s25, 0
      %p46 = por %p44, %p45
      %p47 = scmp.ne.s32.totalorder %s33, %s34
      %p48 = scmp.eq.s32.totalorder %s26, 1
      %p49 = por %p47, %p48
      %p51 = scmp.ne.s32.totalorder %s34, %s50
      %p52 = scmp.eq.s32.totalorder %s26, 0
      %p53 = por %p51, %p52
      %s55 = sadd.s32 %s54, 1
      %p58 = scmp.eq.s32.totalorder %s20, 1
      %p59 = scmp.ne.s32.totalorder %s54, %s56
      %p60 = scmp.eq.s32.totalorder %s20, 0
      %p61 = por %p59, %p60
      %p62 = scmp.ne.s32.totalorder %s54, %s56
      %p63 = scmp.eq.s32.totalorder %s25, 1
      %p64 = por %p62, %p63
      %p65 = scmp.ne.s32.totalorder %s56, %s57
      %p66 = scmp.eq.s32.totalorder %s25, 0
      %p67 = por %p65, %p66
      %p68 = scmp.ne.s32.totalorder %s56, %s57
      %p69 = scmp.eq.s32.totalorder %s26, 1
      %p70 = por %p68, %p69
      %p72 = scmp.ne.s32.totalorder %s57, %s71
      %p73 = scmp.eq.s32.totalorder %s26, 0
      %p74 = por %p72, %p73
      %s76 = sadd.s32 %s75, 1
      %p79 = scmp.eq.s32.totalorder %s20, 1
      %p80 = scmp.ne.s32.totalorder %s75, %s77
      %p81 = scmp.eq.s32.totalorder %s20, 0
      %p82 = por %p80, %p81
      %p83 = scmp.ne.s32.totalorder %s75, %s77
      %p84 = scmp.eq.s32.totalorder %s25, 1
      %p85 = por %p83, %p84
      %p86 = scmp.ne.s32.totalorder %s77, %s78
      %p87 = scmp.eq.s32.totalorder %s25, 0
      %p88 = por %p86, %p87
      %p89 = scmp.ne.s32.totalorder %s77, %s78
      %p90 = scmp.eq.s32.totalorder %s26, 1
      %p91 = por %p89, %p90
      %p93 = scmp.ne.s32.totalorder %s78, %s92
      %p94 = scmp.eq.s32.totalorder %s26, 0
      %p95 = por %p93, %p94
      %s97 = sadd.s32 %s96, 1
      %p100 = scmp.eq.s32.totalorder %s20, 1
      %p101 = scmp.ne.s32.totalorder %s96, %s98
      %p102 = scmp.eq.s32.totalorder %s20, 0
      %p103 = por %p101, %p102
      %p104 = scmp.ne.s32.totalorder %s96, %s98
      %p105 = scmp.eq.s32.totalorder %s25, 1
      %p106 = por %p104, %p105
      %p107 = scmp.ne.s32.totalorder %s98, %s99
      %p108 = scmp.eq.s32.totalorder %s25, 0
      %p109 = por %p107, %p108
      %p110 = scmp.ne.s32.totalorder %s98, %s99
      %p111 = scmp.eq.s32.totalorder %s26, 1
      %p112 = por %p110, %p111
      %p114 = scmp.ne.s32.totalorder %s99, %s113
      %p115 = scmp.eq.s32.totalorder %s26, 0
      %p116 = por %p114, %p115
      %s118 = sadd.s32 %s117, 1
      %p121 = scmp.eq.s32.totalorder %s20, 1
      %p122 = scmp.ne.s32.totalorder %s117, %s119
      %p123 = scmp.eq.s32.totalorder %s20, 0
      %p124 = por %p122, %p123
      %p125 = scmp.ne.s32.totalorder %s117, %s119
      %p126 = scmp.eq.s32.totalorder %s25, 1
      %p127 = por %p125, %p126
      %p128 = scmp.ne.s32.totalorder %s119, %s120
      %p129 = scmp.eq.s32.totalorder %s25, 0
      %p130 = por %p128, %p129
      %p131 = scmp.ne.s32.totalorder %s119, %s120
      %p132 = scmp.eq.s32.totalorder %s26, 1
      %p133 = por %p131, %p132
      %p135 = scmp.ne.s32.totalorder %s120, %s134
      %p136 = scmp.eq.s32.totalorder %s26, 0
      %p137 = por %p135, %p136
      %s139 = sadd.s32 %s138, 1
      %p142 = scmp.eq.s32.totalorder %s20, 1
      %p143 = scmp.ne.s32.totalorder %s138, %s140
      %p144 = scmp.eq.s32.totalorder %s20, 0
      %p145 = por %p143, %p144
      %p146 = scmp.ne.s32.totalorder %s138, %s140
      %p147 = scmp.eq.s32.totalorder %s25, 1
      %p148 = por %p146, %p147
      %p149 = scmp.ne.s32.totalorder %s140, %s141
      %p150 = scmp.eq.s32.totalorder %s25, 0
      %p151 = por %p149, %p150
      %p152 = scmp.ne.s32.totalorder %s140, %s141
      %p153 = scmp.eq.s32.totalorder %s26, 1
      %p154 = por %p152, %p153
      %p156 = scmp.ne.s32.totalorder %s141, %s155
      %p157 = scmp.eq.s32.totalorder %s26, 0
      %p158 = por %p156, %p157
      %s160 = sadd.s32 %s159, 1
      %p163 = scmp.eq.s32.totalorder %s20, 1
      %p164 = scmp.ne.s32.totalorder %s159, %s161
      %p165 = scmp.eq.s32.totalorder %s20, 0
      %p166 = por %p164, %p165
      %p167 = scmp.ne.s32.totalorder %s159, %s161
      %p168 = scmp.eq.s32.totalorder %s25, 1
      %p169 = por %p167, %p168
      %p170 = scmp.ne.s32.totalorder %s161, %s162
      %p171 = scmp.eq.s32.totalorder %s25, 0
      %p172 = por %p170, %p171
      %p173 = scmp.ne.s32.totalorder %s161, %s162
      %p174 = scmp.eq.s32.totalorder %s26, 1
      %p175 = por %p173, %p174
      %p177 = scmp.ne.s32.totalorder %s162, %s176
      %p178 = scmp.eq.s32.totalorder %s26, 0
      %p179 = por %p177, %p178
      %s180 = ssub.s32 %s20, %s27
      %p181 = scmp.eq.s32.totalorder %s180, 0
      %s183 = sadd.s32 %s182, 1
      %s184 = scalar_select %p181, %s182, %s183
      %p187 = pneg %p181
      %p188 = scmp.eq.s32.totalorder %s20, 1
      %p189 = por %p187, %p188
      %p190 = scmp.ne.s32.totalorder %s182, %s185
      %p191 = scmp.eq.s32.totalorder %s20, 0
      %p192 = por %p190, %p191
      %p193 = scmp.ne.s32.totalorder %s182, %s185
      %p194 = scmp.eq.s32.totalorder %s25, 1
      %p195 = por %p193, %p194
      %p196 = scmp.ne.s32.totalorder %s185, %s186
      %p197 = scmp.eq.s32.totalorder %s25, 0
      %p198 = por %p196, %p197
      %p199 = scmp.ne.s32.totalorder %s185, %s186
      %p200 = scmp.eq.s32.totalorder %s26, 1
      %p201 = por %p199, %p200
      %p203 = scmp.ne.s32.totalorder %s186, %s202
      %p204 = scmp.eq.s32.totalorder %s26, 0
      %p205 = por %p203, %p204
      %p206 = scmp.le.s32.totalorder 1, %s20
      %p207 = scmp.lt.s32.totalorder %s20, 3
      %p208 = pnand %p206, %p207
      %p209 = pneg %p208
      // Predicated region
      $region9: #{tpu_custom_call.1} parent=5 // pred_check
        _
      $region10: #{tpu_custom_call.1} parent=5 // pred_check_branch
        %211 = sbr.rel (%p208) target = $region12
      $region11: #{tpu_custom_call.1} parent=5 // pred_region
        %s212 = ssub.s32 %s20, 1
        // Predicated region
        $region13: #{tpu_custom_call.1} parent=11 // pred_check
          %p213 = pneg %p67
        $region14: #{tpu_custom_call.1} parent=11 // pred_check_branch
          %215 = sbr.rel (%p213) target = $region16
        $region15: #{tpu_custom_call.1} parent=11 // pred_region
          %217 = vsyncadd [#allocation7], 0
          %s218 = sshll.u32 %s1, 4
          %s219 = int_to_ptr.hbm [resolvable:$true] %s218
          %s220 = sshll.u32 [#allocation6], 4
          %s221 = int_to_ptr.vmem [resolvable:$true] %s220
          %226 = dma.hbm_to_vmem [thread:$0]  %s219, 3456, %s221, [#allocation7], 64, 64, 4
        $region16: #{tpu_custom_call.1} parent=11 // pred_fallthru
          _
        // Predicated region
        $region17: #{tpu_custom_call.1} parent=11 // pred_check
          %p227 = pneg %p88
        $region18: #{tpu_custom_call.1} parent=11 // pred_check_branch
          %229 = sbr.rel (%p227) target = $region20
        $region19: #{tpu_custom_call.1} parent=11 // pred_region
          _
        $region20: #{tpu_custom_call.1} parent=11 // pred_fallthru
          _
        // Predicated region
        $region21: #{tpu_custom_call.1} parent=11 // pred_check
          %p230 = pneg %p109
        $region22: #{tpu_custom_call.1} parent=11 // pred_check_branch
          %232 = sbr.rel (%p230) target = $region24
        $region23: #{tpu_custom_call.1} parent=11 // pred_region
          _
        $region24: #{tpu_custom_call.1} parent=11 // pred_fallthru
          _
        // Predicated region
        $region25: #{tpu_custom_call.1} parent=11 // pred_check
          %p233 = pneg %p130
        $region26: #{tpu_custom_call.1} parent=11 // pred_check_branch
          %235 = sbr.rel (%p233) target = $region28
        $region27: #{tpu_custom_call.1} parent=11 // pred_region
          %237 = vsyncadd [#allocation7], 0
          %s238 = sshll.u32 %s4, 4
          %s239 = int_to_ptr.hbm [resolvable:$true] %s238
          %s240 = sshll.u32 [#allocation8], 4
          %s241 = int_to_ptr.vmem [resolvable:$true] %s240
          %246 = dma.hbm_to_vmem [thread:$0]  %s239, 3456, %s241, [#allocation7], 64, 64, 4
        $region28: #{tpu_custom_call.1} parent=11 // pred_fallthru
          _
        // Predicated region
        $region29: #{tpu_custom_call.1} parent=11 // pred_check
          %p247 = pneg %p151
        $region30: #{tpu_custom_call.1} parent=11 // pred_check_branch
          %249 = sbr.rel (%p247) target = $region32
        $region31: #{tpu_custom_call.1} parent=11 // pred_region
          _
        $region32: #{tpu_custom_call.1} parent=11 // pred_fallthru
          _
        // Predicated region
        $region33: #{tpu_custom_call.1} parent=11 // pred_check
          %p250 = pneg %p172
        $region34: #{tpu_custom_call.1} parent=11 // pred_check_branch
          %252 = sbr.rel (%p250) target = $region36
        $region35: #{tpu_custom_call.1} parent=11 // pred_region
          _
        $region36: #{tpu_custom_call.1} parent=11 // pred_fallthru
          _
      $region12: #{tpu_custom_call.1} parent=5 // pred_fallthru
        _
      %p253 = scmp.lt.s32.totalorder %s20, 2
      // Predicated region
      $region37: #{tpu_custom_call.1} parent=5 // pred_check
        %p254 = pneg %p253
      $region38: #{tpu_custom_call.1} parent=5 // pred_check_branch
        %256 = sbr.rel (%p254) target = $region40
      $region39: #{tpu_custom_call.1} parent=5 // pred_region
        // Predicated region
        $region41: #{tpu_custom_call.1} parent=39 // pred_check
          %p257 = pneg %p40
        $region42: #{tpu_custom_call.1} parent=39 // pred_check_branch
          %259 = sbr.rel (%p257) target = $region44
        $region43: #{tpu_custom_call.1} parent=39 // pred_region
          %s260 = sand.u32 %s30, 1
          %s261 = scalar_lea.sflag [#allocation4], %s260
          %s262 = sand.u32 %s30, 1
          %s263 = smul.addr %s262, 8
          %s264 = scalar_lea.vmem [#allocation3], %s263
          %266 = vsyncadd %s261, 0
          %s267 = smul.addr %s20, 2
          %s268 = smul.addr %s267, 4
          %s269 = scalar_lea.hbm %s0, %s268
          %s270 = sshll.u32 %s269, 4
          %s271 = int_to_ptr.hbm [resolvable:$true] %s270
          %s272 = sshll.u32 %s264, 4
          %s273 = int_to_ptr.vmem [resolvable:$true] %s272
          %278 = dma.hbm_to_vmem [thread:$0]  %s271, 128, %s273, %s261, 64, 64, 4
        $region44: #{tpu_custom_call.1} parent=39 // pred_fallthru
          _
      $region40: #{tpu_custom_call.1} parent=5 // pred_fallthru
        _
      %p279 = scmp.le.s32.totalorder 1, %s20
      %p280 = scmp.lt.s32.totalorder %s20, 3
      %p281 = pnand %p279, %p280
      %p282 = pneg %p281
      // Predicated region
      $region45: #{tpu_custom_call.1} parent=5 // pred_check
        _
      $region46: #{tpu_custom_call.1} parent=5 // pred_check_branch
        %284 = sbr.rel (%p281) target = $region48
      $region47: #{tpu_custom_call.1} parent=5 // pred_region
        %s285 = ssub.s32 %s20, 1
        %s286 = sand.u32 %s33, 1
        %s287 = scalar_lea.sflag [#allocation4], %s286
        %s288 = sand.u32 %s33, 1
        %s289 = smul.addr %s288, 8
        %s290 = scalar_lea.vmem [#allocation3], %s289
        // Predicated region
        $region49: #{tpu_custom_call.1} parent=47 // pred_check
          %p291 = pneg %p46
        $region50: #{tpu_custom_call.1} parent=47 // pred_check_branch
          %293 = sbr.rel (%p291) target = $region52
        $region51: #{tpu_custom_call.1} parent=47 // pred_region
          %295 = dma.done %s287, 128
        $region52: #{tpu_custom_call.1} parent=47 // pred_fallthru
          _
        // Predicated region
        $region53: #{tpu_custom_call.1} parent=47 // pred_check
          %p296 = pneg %p67
        $region54: #{tpu_custom_call.1} parent=47 // pred_check_branch
          %298 = sbr.rel (%p296) target = $region56
        $region55: #{tpu_custom_call.1} parent=47 // pred_region
          %300 = dma.done [#allocation7], 3456
        $region56: #{tpu_custom_call.1} parent=47 // pred_fallthru
          _
        // Predicated region
        $region57: #{tpu_custom_call.1} parent=47 // pred_check
          %p301 = pneg %p130
        $region58: #{tpu_custom_call.1} parent=47 // pred_check_branch
          %303 = sbr.rel (%p301) target = $region60
        $region59: #{tpu_custom_call.1} parent=47 // pred_region
          %305 = dma.done [#allocation7], 3456
        $region60: #{tpu_custom_call.1} parent=47 // pred_fallthru
          _
        %s306 = sand.u32 %s33, 1
        %s307 = scalar_lea.sflag [#allocation4], %s306
        %s308 = sand.u32 %s33, 1
        %s309 = smul.addr %s308, 8
        %s310 = scalar_lea.vmem [#allocation3], %s309
        %p311 = pneg %p46
        %p312 = pneg %p43
        %p313 = pneg %p67
        %p314 = pneg %p64
        %p315 = pneg %p88
        %p316 = pneg %p85
        %p317 = pneg %p109
        %p318 = pneg %p106
        %p319 = pneg %p130
        %p320 = pneg %p127
        %p321 = pneg %p151
        %p322 = pneg %p148
        %p323 = pneg %p172
        %p324 = pneg %p169
        %p325 = pneg %p198
        %p326 = pneg %p195
        %s327 = sand.u32 %s185, 1
        %s328 = scalar_lea.sflag [#allocation5], %s327
        %s329 = sand.u32 %s185, 1
        %s330 = smul.addr %s329, 16
        %s331 = scalar_lea.vmem [#allocation9], %s330
        %vm333 = vcmask 1040384
        %vm334 = vsmask.f32 256
        %vm335 = vmand %vm333, %vm334
        %vm336 = vcmask 126980
        %vm337 = vsmask.f32 4352
        %vm338 = vmand %vm336, %vm337
        %vm339 = vmor %vm338, %vm335
        %v340 = vld [vmem:[#allocation2] sm:$0x11]
        %v341 = vsel %vm339, 0, %v340
        %342 = vst [vmem:[#allocation2] sm:$0x11] %v341
        %vm343 = vsmask.f32 7938
        %vm344 = vmand %vm333, %vm343
        %vm345 = vsmask.f32 7954
        %vm346 = vmand %vm336, %vm345
        %vm347 = vmor %vm346, %vm344
        %v348 = vld [vmem:[#allocation2 + $0x10] sm:$0x11]
        %v349 = vsel %vm347, 0, %v348
        %350 = vst [vmem:[#allocation2 + $0x10] sm:$0x11] %v349
        %vm351 = vcmask 60416
        %vm352 = vmand %vm351, %vm343
        %v353 = vld [vmem:[#allocation2] sm:$0xf]
        %v354 = vsel %vm352, 0, %v353
        %355 = vst [vmem:[#allocation2] sm:$0xf] %v354
        %vm356 = vcmask 60416
        %357 = vst.msk [vmem:[#allocation2 + $0x8] sm:$0xf] %vm356, 0
        %vm358 = vcmask 57344
        %vm359 = vmand %vm358, %vm334
        %v360 = vld [vmem:[#allocation2 + $0x10] sm:$0x1]
        %v361 = vsel %vm359, 0, %v360
        %362 = vst [vmem:[#allocation2 + $0x10] sm:$0x1] %v361
        %vm363 = vcmask 126016
        %vm364 = vmand %vm363, %vm343
        %v365 = vld [vmem:[#allocation2 + $0x4] sm:$0xf]
        %v366 = vsel %vm364, 0, %v365
        %367 = vst [vmem:[#allocation2 + $0x4] sm:$0xf] %v366
        %vm368 = vcmask 126016
        %369 = vst.msk [vmem:[#allocation2 + $0xc] sm:$0xf] %vm368, 0
        %vm370 = vcmask 122944
        %vm371 = vmand %vm370, %vm334
        %v372 = vld [vmem:[#allocation2 + $0x14] sm:$0x1]
        %v373 = vsel %vm371, 0, %v372
        %374 = vst [vmem:[#allocation2 + $0x14] sm:$0x1] %v373
        %v375 = vld [vmem:[%s290] sm:$0xf]
        %v376 = vld [vmem:[%s290 + $0x4] sm:$0xf]
        %vm377 = vsmask.f32 4368
        %vm378 = vmor %vm334, %vm377
        %v380 = vshrl.u32 %v375, 16
        %v382 = vrot.slane %v380, 7
        %v383 = vshll.u32 %v375, 16
        %v385 = vor.u32 %v382, %v383
        %v386 = vrot.slane %v382, 4
        %v388 = vshrl.u32 %v376, 16
        %v390 = vrot.slane %v388, 7
        %v391 = vshll.u32 %v376, 16
        %v393 = vor.u32 %v390, %v391
        %v394 = vsel %vm378, %v386, %v393
        %v395 = vrot.slane %v390, 4
        %396 = vrot.lane.b32.xlu0 %v385, 8
        %v397 = vpop.permute.xlu0 %396
        %398 = vrot.lane.b32.xlu0 %v394, 8
        %v399 = vpop.permute.xlu0 %398
        %400 = vrot.lane.b32.xlu0 %v395, 8
        %v401 = vpop.permute.xlu0 %400
        %v402 = vrot.slane %v397, 4
        %v403 = vrot.slane %v399, 4
        %v404 = vrot.slane %v401, 4
        %vm405 = vcmask 64512
        %v406 = vsel %vm405, %v402, %v397
        %v407 = vsel %vm405, %v403, %v399
        %v408 = vsel %vm405, %v404, %v401
        %vm412 = vcmask 1043520
        %vm413 = vmand %vm412, %vm343
        %vm414 = vcmask 64516
        %vm415 = vmand %vm414, %vm345
        %vm416 = vmor %vm415, %vm413
        %v417 = vld [vmem:[#allocation2] sm:$0xff]
        %v418 = vsel %vm416, %v406, %v417
        %419 = vst [vmem:[#allocation2] sm:$0xff] %v418
        %vm420 = vcmask 1043520
        %vm421 = vcmask 64516
        %vm422 = vmor %vm421, %vm420
        %423 = vst.msk [vmem:[#allocation2 + $0x8] sm:$0xff] %vm422, %v407
        %vm424 = vcmask 1040448
        %vm425 = vmand %vm424, %vm334
        %vm426 = vcmask 61444
        %vm427 = vmand %vm426, %vm337
        %vm428 = vmor %vm427, %vm425
        %v429 = vld [vmem:[#allocation2 + $0x10] sm:$0x11]
        %v430 = vsel %vm428, %v408, %v429
        %431 = vst [vmem:[#allocation2 + $0x10] sm:$0x11] %v430
        %v432 = vld [vmem:[#allocation2] sm:$0xff]
        %v433 = vld [vmem:[#allocation2 + $0x8] sm:$0xff]
        %v434 = vld [vmem:[#allocation6] sm:$0xf]
        %v435 = vld [vmem:[#allocation6 + $0x4] sm:$0xf]
        %v436 = vld [vmem:[#allocation6 + $0x8] sm:$0xf]
        %v437 = vld [vmem:[#allocation6 + $0xc] sm:$0xf]
        %v438 = vld [vmem:[#allocation6 + $0x10] sm:$0xf]
        %v439 = vld [vmem:[#allocation6 + $0x14] sm:$0xf]
        %v440 = vld [vmem:[#allocation6 + $0x18] sm:$0xf]
        %v441 = vld [vmem:[#allocation6 + $0x1c] sm:$0xf]
        %v442 = vld [vmem:[#allocation6 + $0x20] sm:$0xf]
        %v443 = vld [vmem:[#allocation6 + $0x24] sm:$0xf]
        %v444 = vld [vmem:[#allocation6 + $0x28] sm:$0xf]
        %v445 = vld [vmem:[#allocation6 + $0x2c] sm:$0xf]
        %v446 = vld [vmem:[#allocation6 + $0x30] sm:$0xf]
        %v447 = vld [vmem:[#allocation6 + $0x34] sm:$0xf]
        %v448 = vld [vmem:[#allocation6 + $0x38] sm:$0xf]
        %v449 = vld [vmem:[#allocation6 + $0x3c] sm:$0xf]
        %v450 = vld [vmem:[#allocation6 + $0x40] sm:$0xf]
        %v451 = vld [vmem:[#allocation6 + $0x44] sm:$0xf]
        %v452 = vld [vmem:[#allocation2 + $0x10] sm:$0x11]
        %s453 = scalar_lea.vmem [#allocation6], 72
        %v454 = vld [vmem:[%s453] sm:$0xf]
        %v455 = vld [vmem:[%s453 + $0x4] sm:$0xf]
        %v456 = vld [vmem:[%s453 + $0x8] sm:$0xf]
        %v457 = vld [vmem:[%s453 + $0xc] sm:$0xf]
        %v458 = vld [vmem:[%s453 + $0x10] sm:$0xf]
        %v459 = vld [vmem:[%s453 + $0x14] sm:$0xf]
        %v460 = vld [vmem:[%s453 + $0x18] sm:$0xf]
        %v461 = vld [vmem:[%s453 + $0x1c] sm:$0xf]
        %v462 = vld [vmem:[%s453 + $0x20] sm:$0xf]
        %v463 = vld [vmem:[%s453 + $0x24] sm:$0xf]
        %v464 = vld [vmem:[%s453 + $0x28] sm:$0xf]
        %v465 = vld [vmem:[%s453 + $0x2c] sm:$0xf]
        %v466 = vld [vmem:[%s453 + $0x30] sm:$0xf]
        %v467 = vld [vmem:[%s453 + $0x34] sm:$0xf]
        %v468 = vld [vmem:[%s453 + $0x38] sm:$0xf]
        %v469 = vld [vmem:[%s453 + $0x3c] sm:$0xf]
        %v470 = vld [vmem:[%s453 + $0x40] sm:$0xf]
        %v471 = vld [vmem:[%s453 + $0x44] sm:$0xf]
        %v475 = vunpack.c.l.b16 %v432
        %v476 = vunpack.c.h.b16 %v432
        %v477 = vunpack.c.l.b16 %v433
        %v478 = vunpack.c.h.b16 %v433
        %v479 = vunpack.c.l.b16 %v452
        %v480 = vunpack.c.h.b16 %v452
        %v481 = vpack.c.b16 %v477, %v475
        %v482 = vpack.c.b16 %v478, %v476
        %v483 = vpack.c.b16 %v479, %v479
        %v484 = vpack.c.b16 %v480, %v480
        %vm485 = vsmask.f32 7424
        %v487 = vshrl.u32 %v481, 16
        %v489 = vshll.u32 %v481, 16
        %v491 = vrot.slane %v489, 1
        %v492 = vor.u32 %v487, %v491
        %v494 = vshll.u32 %v483, 16
        %v496 = vrot.slane %v494, 1
        %v497 = vsel %vm485, %v492, %v496
        %v499 = vshrl.u32 %v482, 16
        %v501 = vshll.u32 %v482, 16
        %v503 = vrot.slane %v501, 1
        %v504 = vor.u32 %v499, %v503
        %v506 = vshll.u32 %v484, 16
        %v508 = vrot.slane %v506, 1
        %v509 = vsel %vm485, %v504, %v508
        %v529 = vunpack.c.l.b16 %v454
        %v530 = vunpack.c.l.b16 %v455
        %v531 = vunpack.c.l.b16 %v456
        %v532 = vunpack.c.l.b16 %v457
        %v533 = vunpack.c.l.b16 %v458
        %v534 = vunpack.c.l.b16 %v459
        %v535 = vunpack.c.l.b16 %v460
        %v536 = vunpack.c.l.b16 %v461
        %v537 = vunpack.c.l.b16 %v462
        %v538 = vunpack.c.l.b16 %v463
        %v539 = vunpack.c.l.b16 %v464
        %v540 = vunpack.c.l.b16 %v465
        %v541 = vunpack.c.l.b16 %v466
        %v542 = vunpack.c.l.b16 %v467
        %v543 = vunpack.c.l.b16 %v468
        %v544 = vunpack.c.l.b16 %v469
        %v545 = vunpack.c.l.b16 %v470
        %v546 = vunpack.c.l.b16 %v471
        %v547 = vpack.c.b16 %v530, %v529
        %v548 = vpack.c.b16 %v532, %v531
        %v549 = vpack.c.b16 %v534, %v533
        %v550 = vpack.c.b16 %v536, %v535
        %v551 = vpack.c.b16 %v538, %v537
        %v552 = vpack.c.b16 %v540, %v539
        %v553 = vpack.c.b16 %v542, %v541
        %v554 = vpack.c.b16 %v544, %v543
        %v555 = vpack.c.b16 %v546, %v545
        %vm565 = vcmask 130048
        %v567 = vsel %vm565, %v509, 0
        %569 = vmatpush.bf16.msra.mxu0 %v554
        %570 = vmatpush.bf16.msra.mxu0 %v553
        %571 = vmatpush.bf16.msra.mxu0 %v552
        %572 = vmatpush.bf16.msra.mxu0 %v551
        %573 = vmatpush.bf16.msra.mxu0 %v550
        %574 = vmatpush.bf16.msra.mxu0 %v549
        %575 = vmatpush.bf16.msra.mxu0 %v548
        %576 = vmatpush.bf16.msra.mxu0 %v547
        %577 = vmatmul.bf16.gmra.mxu0 %v497
        %v578 = vpop.f32.mrf.mxu0
        %v579 = vadd.f32 0.0, %v578
        %v580 = vpop.f32.mrf.mxu0
        %v581 = vadd.f32 0.0, %v580
        %582 = vdwg.mxu0
        %583 = vmatpush.bf16.msra.mxu0 0
        %584 = vmatpush.bf16.msra.mxu0 0
        %585 = vmatpush.bf16.msra.mxu0 0
        %586 = vmatpush.bf16.msra.mxu0 0
        %587 = vmatpush.bf16.msra.mxu0 0
        %588 = vmatpush.bf16.msra.mxu0 0
        %589 = vmatpush.bf16.msra.mxu0 0
        %590 = vmatpush.bf16.msra.mxu0 %v555
        %591 = vmatmul.bf16.gmra.mxu0 %v567
        %v592 = vpop.f32.mrf.mxu0
        %v593 = vadd.f32 %v579, %v592
        %v594 = vpop.f32.mrf.mxu0
        %v595 = vadd.f32 %v581, %v594
        %596 = vdwg.mxu0
        %v616 = vunpack.c.l.b16 %v434
        %v617 = vunpack.c.l.b16 %v435
        %v618 = vunpack.c.l.b16 %v436
        %v619 = vunpack.c.l.b16 %v437
        %v620 = vunpack.c.l.b16 %v438
        %v621 = vunpack.c.l.b16 %v439
        %v622 = vunpack.c.l.b16 %v440
        %v623 = vunpack.c.l.b16 %v441
        %v624 = vunpack.c.l.b16 %v442
        %v625 = vunpack.c.l.b16 %v443
        %v626 = vunpack.c.l.b16 %v444
        %v627 = vunpack.c.l.b16 %v445
        %v628 = vunpack.c.l.b16 %v446
        %v629 = vunpack.c.l.b16 %v447
        %v630 = vunpack.c.l.b16 %v448
        %v631 = vunpack.c.l.b16 %v449
        %v632 = vunpack.c.l.b16 %v450
        %v633 = vunpack.c.l.b16 %v451
        %v634 = vpack.c.b16 %v617, %v616
        %v635 = vpack.c.b16 %v619, %v618
        %v636 = vpack.c.b16 %v621, %v620
        %v637 = vpack.c.b16 %v623, %v622
        %v638 = vpack.c.b16 %v625, %v624
        %v639 = vpack.c.b16 %v627, %v626
        %v640 = vpack.c.b16 %v629, %v628
        %v641 = vpack.c.b16 %v631, %v630
        %v642 = vpack.c.b16 %v633, %v632
        %v652 = vsel %vm565, %v482, 0
        %654 = vmatpush.bf16.msra.mxu0 %v641
        %655 = vmatpush.bf16.msra.mxu0 %v640
        %656 = vmatpush.bf16.msra.mxu0 %v639
        %657 = vmatpush.bf16.msra.mxu0 %v638
        %658 = vmatpush.bf16.msra.mxu0 %v637
        %659 = vmatpush.bf16.msra.mxu0 %v636
        %660 = vmatpush.bf16.msra.mxu0 %v635
        %661 = vmatpush.bf16.msra.mxu0 %v634
        %662 = vmatmul.bf16.gmra.mxu0 %v481
        %v663 = vpop.f32.mrf.mxu0
        %v664 = vadd.f32 %v593, %v663
        %v665 = vpop.f32.mrf.mxu0
        %v666 = vadd.f32 %v595, %v665
        %667 = vdwg.mxu0
        %668 = vmatpush.bf16.msra.mxu0 0
        %669 = vmatpush.bf16.msra.mxu0 0
        %670 = vmatpush.bf16.msra.mxu0 0
        %671 = vmatpush.bf16.msra.mxu0 0
        %672 = vmatpush.bf16.msra.mxu0 0
        %673 = vmatpush.bf16.msra.mxu0 0
        %674 = vmatpush.bf16.msra.mxu0 0
        %675 = vmatpush.bf16.msra.mxu0 %v642
        %676 = vmatmul.bf16.gmra.mxu0 %v652
        %v677 = vpop.f32.mrf.mxu0
        %v678 = vadd.f32 %v664, %v677
        %v679 = vpop.f32.mrf.mxu0
        %v680 = vadd.f32 %v666, %v679
        %681 = vdwg.mxu0
        %v682 = vld [vmem:[#allocation2] sm:$0xee]
        %s683 = scalar_lea.vmem [#allocation6], 144
        %v684 = vld [vmem:[%s683] sm:$0xf]
        %v685 = vld [vmem:[%s683 + $0x4] sm:$0xf]
        %v686 = vld [vmem:[%s683 + $0x8] sm:$0xf]
        %v687 = vld [vmem:[%s683 + $0xc] sm:$0xf]
        %v688 = vld [vmem:[%s683 + $0x10] sm:$0xf]
        %v689 = vld [vmem:[%s683 + $0x14] sm:$0xf]
        %v690 = vld [vmem:[%s683 + $0x18] sm:$0xf]
        %v691 = vld [vmem:[%s683 + $0x1c] sm:$0xf]
        %v692 = vld [vmem:[%s683 + $0x20] sm:$0xf]
        %v693 = vld [vmem:[%s683 + $0x24] sm:$0xf]
        %v694 = vld [vmem:[%s683 + $0x28] sm:$0xf]
        %v695 = vld [vmem:[%s683 + $0x2c] sm:$0xf]
        %v696 = vld [vmem:[%s683 + $0x30] sm:$0xf]
        %v697 = vld [vmem:[%s683 + $0x34] sm:$0xf]
        %v698 = vld [vmem:[%s683 + $0x38] sm:$0xf]
        %v699 = vld [vmem:[%s683 + $0x3c] sm:$0xf]
        %v700 = vld [vmem:[%s683 + $0x40] sm:$0xf]
        %v701 = vld [vmem:[%s683 + $0x44] sm:$0xf]
        %v703 = vunpack.c.l.b16 %v682
        %v704 = vunpack.c.h.b16 %v682
        %v705 = vpack.c.b16 %v477, %v703
        %v706 = vpack.c.b16 %v478, %v704
        %vm707 = vcmask 1046528
        %v708 = vrot.slane %v705, 1
        %v709 = vrot.slane %v483, 1
        %v710 = vsel %vm707, %v708, %v709
        %v711 = vrot.slane %v706, 1
        %v712 = vrot.slane %v484, 1
        %v713 = vsel %vm707, %v711, %v712
        %v733 = vunpack.c.l.b16 %v684
        %v734 = vunpack.c.l.b16 %v685
        %v735 = vunpack.c.l.b16 %v686
        %v736 = vunpack.c.l.b16 %v687
        %v737 = vunpack.c.l.b16 %v688
        %v738 = vunpack.c.l.b16 %v689
        %v739 = vunpack.c.l.b16 %v690
        %v740 = vunpack.c.l.b16 %v691
        %v741 = vunpack.c.l.b16 %v692
        %v742 = vunpack.c.l.b16 %v693
        %v743 = vunpack.c.l.b16 %v694
        %v744 = vunpack.c.l.b16 %v695
        %v745 = vunpack.c.l.b16 %v696
        %v746 = vunpack.c.l.b16 %v697
        %v747 = vunpack.c.l.b16 %v698
        %v748 = vunpack.c.l.b16 %v699
        %v749 = vunpack.c.l.b16 %v700
        %v750 = vunpack.c.l.b16 %v701
        %v751 = vpack.c.b16 %v734, %v733
        %v752 = vpack.c.b16 %v736, %v735
        %v753 = vpack.c.b16 %v738, %v737
        %v754 = vpack.c.b16 %v740, %v739
        %v755 = vpack.c.b16 %v742, %v741
        %v756 = vpack.c.b16 %v744, %v743
        %v757 = vpack.c.b16 %v746, %v745
        %v758 = vpack.c.b16 %v748, %v747
        %v759 = vpack.c.b16 %v750, %v749
        %v770 = vsel %vm565, %v713, 0
        %772 = vmatpush.bf16.msra.mxu0 %v758
        %773 = vmatpush.bf16.msra.mxu0 %v757
        %774 = vmatpush.bf16.msra.mxu0 %v756
        %775 = vmatpush.bf16.msra.mxu0 %v755
        %776 = vmatpush.bf16.msra.mxu0 %v754
        %777 = vmatpush.bf16.msra.mxu0 %v753
        %778 = vmatpush.bf16.msra.mxu0 %v752
        %779 = vmatpush.bf16.msra.mxu0 %v751
        %780 = vmatmul.bf16.gmra.mxu0 %v710
        %v781 = vpop.f32.mrf.mxu0
        %v782 = vadd.f32 0.0, %v781
        %v783 = vpop.f32.mrf.mxu0
        %v784 = vadd.f32 0.0, %v783
        %785 = vdwg.mxu0
        %786 = vmatpush.bf16.msra.mxu0 0
        %787 = vmatpush.bf16.msra.mxu0 0
        %788 = vmatpush.bf16.msra.mxu0 0
        %789 = vmatpush.bf16.msra.mxu0 0
        %790 = vmatpush.bf16.msra.mxu0 0
        %791 = vmatpush.bf16.msra.mxu0 0
        %792 = vmatpush.bf16.msra.mxu0 0
        %793 = vmatpush.bf16.msra.mxu0 %v759
        %794 = vmatmul.bf16.gmra.mxu0 %v770
        %v795 = vpop.f32.mrf.mxu0
        %v796 = vadd.f32 %v782, %v795
        %v797 = vpop.f32.mrf.mxu0
        %v798 = vadd.f32 %v784, %v797
        %799 = vdwg.mxu0
        %v800 = vadd.f32 %v678, %v796
        %v801 = vadd.f32 %v680, %v798
        %v802 = vld [vmem:[%s2] sm:$0x1]
        %v804 = vperm.slane %v802, 0
        %v806 = vmul.f32 %v800, %v804
        %v807 = vmul.f32 %v801, %v804
        %v808 = vld [vmem:[%s3] sm:$0x1]
        %v810 = vperm.slane %v808, 0
        %v812 = vadd.f32 %v806, %v810
        %v813 = vadd.f32 %v807, %v810
        %v814 = vmax.f32 %v812, 0.0
        %v815 = vmax.f32 %v813, 0.0
        %v816 = vpack.c.bf16 %v814, %v814
        %v817 = vpack.c.bf16 %v815, %v815
        %v819 = vshrl.u32 %v816, 16
        %v821 = vrot.slane %v819, 7
        %v822 = vshll.u32 %v816, 16
        %v824 = vor.u32 %v821, %v822
        %v825 = vrot.slane %v821, 4
        %v827 = vshrl.u32 %v817, 16
        %v829 = vrot.slane %v827, 7
        %v830 = vshll.u32 %v817, 16
        %v832 = vor.u32 %v829, %v830
        %v833 = vsel %vm378, %v825, %v832
        %v834 = vrot.slane %v829, 4
        %835 = vrot.lane.b32.xlu0 %v824, 8
        %v836 = vpop.permute.xlu0 %835
        %837 = vrot.lane.b32.xlu0 %v833, 8
        %v838 = vpop.permute.xlu0 %837
        %839 = vrot.lane.b32.xlu0 %v834, 8
        %v840 = vpop.permute.xlu0 %839
        %v841 = vrot.slane %v836, 4
        %v842 = vrot.slane %v838, 4
        %v843 = vrot.slane %v840, 4
        %v844 = vsel %vm405, %v841, %v836
        %v845 = vsel %vm405, %v842, %v838
        %v846 = vsel %vm405, %v843, %v840
        %v850 = vsel %vm416, %v844, %v432
        %851 = vst [vmem:[#allocation2] sm:$0xff] %v850
        %852 = vst.msk [vmem:[#allocation2 + $0x8] sm:$0xff] %vm422, %v845
        %v853 = vld [vmem:[#allocation2 + $0x10] sm:$0x11]
        %v854 = vsel %vm428, %v846, %v853
        %855 = vst [vmem:[#allocation2 + $0x10] sm:$0x11] %v854
        %v856 = vld [vmem:[#allocation2] sm:$0xff]
        %v857 = vld [vmem:[#allocation2 + $0x8] sm:$0xff]
        %v858 = vld [vmem:[#allocation8] sm:$0xf]
        %v859 = vld [vmem:[#allocation8 + $0x4] sm:$0xf]
        %v860 = vld [vmem:[#allocation8 + $0x8] sm:$0xf]
        %v861 = vld [vmem:[#allocation8 + $0xc] sm:$0xf]
        %v862 = vld [vmem:[#allocation8 + $0x10] sm:$0xf]
        %v863 = vld [vmem:[#allocation8 + $0x14] sm:$0xf]
        %v864 = vld [vmem:[#allocation8 + $0x18] sm:$0xf]
        %v865 = vld [vmem:[#allocation8 + $0x1c] sm:$0xf]
        %v866 = vld [vmem:[#allocation8 + $0x20] sm:$0xf]
        %v867 = vld [vmem:[#allocation8 + $0x24] sm:$0xf]
        %v868 = vld [vmem:[#allocation8 + $0x28] sm:$0xf]
        %v869 = vld [vmem:[#allocation8 + $0x2c] sm:$0xf]
        %v870 = vld [vmem:[#allocation8 + $0x30] sm:$0xf]
        %v871 = vld [vmem:[#allocation8 + $0x34] sm:$0xf]
        %v872 = vld [vmem:[#allocation8 + $0x38] sm:$0xf]
        %v873 = vld [vmem:[#allocation8 + $0x3c] sm:$0xf]
        %v874 = vld [vmem:[#allocation8 + $0x40] sm:$0xf]
        %v875 = vld [vmem:[#allocation8 + $0x44] sm:$0xf]
        %v876 = vld [vmem:[#allocation2 + $0x10] sm:$0x11]
        %s877 = scalar_lea.vmem [#allocation8], 72
        %v878 = vld [vmem:[%s877] sm:$0xf]
        %v879 = vld [vmem:[%s877 + $0x4] sm:$0xf]
        %v880 = vld [vmem:[%s877 + $0x8] sm:$0xf]
        %v881 = vld [vmem:[%s877 + $0xc] sm:$0xf]
        %v882 = vld [vmem:[%s877 + $0x10] sm:$0xf]
        %v883 = vld [vmem:[%s877 + $0x14] sm:$0xf]
        %v884 = vld [vmem:[%s877 + $0x18] sm:$0xf]
        %v885 = vld [vmem:[%s877 + $0x1c] sm:$0xf]
        %v886 = vld [vmem:[%s877 + $0x20] sm:$0xf]
        %v887 = vld [vmem:[%s877 + $0x24] sm:$0xf]
        %v888 = vld [vmem:[%s877 + $0x28] sm:$0xf]
        %v889 = vld [vmem:[%s877 + $0x2c] sm:$0xf]
        %v890 = vld [vmem:[%s877 + $0x30] sm:$0xf]
        %v891 = vld [vmem:[%s877 + $0x34] sm:$0xf]
        %v892 = vld [vmem:[%s877 + $0x38] sm:$0xf]
        %v893 = vld [vmem:[%s877 + $0x3c] sm:$0xf]
        %v894 = vld [vmem:[%s877 + $0x40] sm:$0xf]
        %v895 = vld [vmem:[%s877 + $0x44] sm:$0xf]
        %v899 = vunpack.c.l.b16 %v856
        %v900 = vunpack.c.h.b16 %v856
        %v901 = vunpack.c.l.b16 %v857
        %v902 = vunpack.c.h.b16 %v857
        %v903 = vunpack.c.l.b16 %v876
        %v904 = vunpack.c.h.b16 %v876
        %v905 = vpack.c.b16 %v901, %v899
        %v906 = vpack.c.b16 %v902, %v900
        %v907 = vpack.c.b16 %v903, %v903
        %v908 = vpack.c.b16 %v904, %v904
        %v910 = vshrl.u32 %v905, 16
        %v912 = vshll.u32 %v905, 16
        %v914 = vrot.slane %v912, 1
        %v915 = vor.u32 %v910, %v914
        %v917 = vshll.u32 %v907, 16
        %v919 = vrot.slane %v917, 1
        %v920 = vsel %vm485, %v915, %v919
        %v922 = vshrl.u32 %v906, 16
        %v924 = vshll.u32 %v906, 16
        %v926 = vrot.slane %v924, 1
        %v927 = vor.u32 %v922, %v926
        %v929 = vshll.u32 %v908, 16
        %v931 = vrot.slane %v929, 1
        %v932 = vsel %vm485, %v927, %v931
        %v952 = vunpack.c.l.b16 %v878
        %v953 = vunpack.c.l.b16 %v879
        %v954 = vunpack.c.l.b16 %v880
        %v955 = vunpack.c.l.b16 %v881
        %v956 = vunpack.c.l.b16 %v882
        %v957 = vunpack.c.l.b16 %v883
        %v958 = vunpack.c.l.b16 %v884
        %v959 = vunpack.c.l.b16 %v885
        %v960 = vunpack.c.l.b16 %v886
        %v961 = vunpack.c.l.b16 %v887
        %v962 = vunpack.c.l.b16 %v888
        %v963 = vunpack.c.l.b16 %v889
        %v964 = vunpack.c.l.b16 %v890
        %v965 = vunpack.c.l.b16 %v891
        %v966 = vunpack.c.l.b16 %v892
        %v967 = vunpack.c.l.b16 %v893
        %v968 = vunpack.c.l.b16 %v894
        %v969 = vunpack.c.l.b16 %v895
        %v970 = vpack.c.b16 %v953, %v952
        %v971 = vpack.c.b16 %v955, %v954
        %v972 = vpack.c.b16 %v957, %v956
        %v973 = vpack.c.b16 %v959, %v958
        %v974 = vpack.c.b16 %v961, %v960
        %v975 = vpack.c.b16 %v963, %v962
        %v976 = vpack.c.b16 %v965, %v964
        %v977 = vpack.c.b16 %v967, %v966
        %v978 = vpack.c.b16 %v969, %v968
        %v989 = vsel %vm565, %v932, 0
        %991 = vmatpush.bf16.msra.mxu0 %v977
        %992 = vmatpush.bf16.msra.mxu0 %v976
        %993 = vmatpush.bf16.msra.mxu0 %v975
        %994 = vmatpush.bf16.msra.mxu0 %v974
        %995 = vmatpush.bf16.msra.mxu0 %v973
        %996 = vmatpush.bf16.msra.mxu0 %v972
        %997 = vmatpush.bf16.msra.mxu0 %v971
        %998 = vmatpush.bf16.msra.mxu0 %v970
        %999 = vmatmul.bf16.gmra.mxu0 %v920
        %v1000 = vpop.f32.mrf.mxu0
        %v1001 = vadd.f32 0.0, %v1000
        %v1002 = vpop.f32.mrf.mxu0
        %v1003 = vadd.f32 0.0, %v1002
        %1004 = vdwg.mxu0
        %1005 = vmatpush.bf16.msra.mxu0 0
        %1006 = vmatpush.bf16.msra.mxu0 0
        %1007 = vmatpush.bf16.msra.mxu0 0
        %1008 = vmatpush.bf16.msra.mxu0 0
        %1009 = vmatpush.bf16.msra.mxu0 0
        %1010 = vmatpush.bf16.msra.mxu0 0
        %1011 = vmatpush.bf16.msra.mxu0 0
        %1012 = vmatpush.bf16.msra.mxu0 %v978
        %1013 = vmatmul.bf16.gmra.mxu0 %v989
        %v1014 = vpop.f32.mrf.mxu0
        %v1015 = vadd.f32 %v1001, %v1014
        %v1016 = vpop.f32.mrf.mxu0
        %v1017 = vadd.f32 %v1003, %v1016
        %1018 = vdwg.mxu0
        %v1038 = vunpack.c.l.b16 %v858
        %v1039 = vunpack.c.l.b16 %v859
        %v1040 = vunpack.c.l.b16 %v860
        %v1041 = vunpack.c.l.b16 %v861
        %v1042 = vunpack.c.l.b16 %v862
        %v1043 = vunpack.c.l.b16 %v863
        %v1044 = vunpack.c.l.b16 %v864
        %v1045 = vunpack.c.l.b16 %v865
        %v1046 = vunpack.c.l.b16 %v866
        %v1047 = vunpack.c.l.b16 %v867
        %v1048 = vunpack.c.l.b16 %v868
        %v1049 = vunpack.c.l.b16 %v869
        %v1050 = vunpack.c.l.b16 %v870
        %v1051 = vunpack.c.l.b16 %v871
        %v1052 = vunpack.c.l.b16 %v872
        %v1053 = vunpack.c.l.b16 %v873
        %v1054 = vunpack.c.l.b16 %v874
        %v1055 = vunpack.c.l.b16 %v875
        %v1056 = vpack.c.b16 %v1039, %v1038
        %v1057 = vpack.c.b16 %v1041, %v1040
        %v1058 = vpack.c.b16 %v1043, %v1042
        %v1059 = vpack.c.b16 %v1045, %v1044
        %v1060 = vpack.c.b16 %v1047, %v1046
        %v1061 = vpack.c.b16 %v1049, %v1048
        %v1062 = vpack.c.b16 %v1051, %v1050
        %v1063 = vpack.c.b16 %v1053, %v1052
        %v1064 = vpack.c.b16 %v1055, %v1054
        %v1074 = vsel %vm565, %v906, 0
        %1076 = vmatpush.bf16.msra.mxu0 %v1063
        %1077 = vmatpush.bf16.msra.mxu0 %v1062
        %1078 = vmatpush.bf16.msra.mxu0 %v1061
        %1079 = vmatpush.bf16.msra.mxu0 %v1060
        %1080 = vmatpush.bf16.msra.mxu0 %v1059
        %1081 = vmatpush.bf16.msra.mxu0 %v1058
        %1082 = vmatpush.bf16.msra.mxu0 %v1057
        %1083 = vmatpush.bf16.msra.mxu0 %v1056
        %1084 = vmatmul.bf16.gmra.mxu0 %v905
        %v1085 = vpop.f32.mrf.mxu0
        %v1086 = vadd.f32 %v1015, %v1085
        %v1087 = vpop.f32.mrf.mxu0
        %v1088 = vadd.f32 %v1017, %v1087
        %1089 = vdwg.mxu0
        %1090 = vmatpush.bf16.msra.mxu0 0
        %1091 = vmatpush.bf16.msra.mxu0 0
        %1092 = vmatpush.bf16.msra.mxu0 0
        %1093 = vmatpush.bf16.msra.mxu0 0
        %1094 = vmatpush.bf16.msra.mxu0 0
        %1095 = vmatpush.bf16.msra.mxu0 0
        %1096 = vmatpush.bf16.msra.mxu0 0
        %1097 = vmatpush.bf16.msra.mxu0 %v1064
        %1098 = vmatmul.bf16.gmra.mxu0 %v1074
        %v1099 = vpop.f32.mrf.mxu0
        %v1100 = vadd.f32 %v1086, %v1099
        %v1101 = vpop.f32.mrf.mxu0
        %v1102 = vadd.f32 %v1088, %v1101
        %1103 = vdwg.mxu0
        %v1104 = vld [vmem:[#allocation2] sm:$0xee]
        %s1105 = scalar_lea.vmem [#allocation8], 144
        %v1106 = vld [vmem:[%s1105] sm:$0xf]
        %v1107 = vld [vmem:[%s1105 + $0x4] sm:$0xf]
        %v1108 = vld [vmem:[%s1105 + $0x8] sm:$0xf]
        %v1109 = vld [vmem:[%s1105 + $0xc] sm:$0xf]
        %v1110 = vld [vmem:[%s1105 + $0x10] sm:$0xf]
        %v1111 = vld [vmem:[%s1105 + $0x14] sm:$0xf]
        %v1112 = vld [vmem:[%s1105 + $0x18] sm:$0xf]
        %v1113 = vld [vmem:[%s1105 + $0x1c] sm:$0xf]
        %v1114 = vld [vmem:[%s1105 + $0x20] sm:$0xf]
        %v1115 = vld [vmem:[%s1105 + $0x24] sm:$0xf]
        %v1116 = vld [vmem:[%s1105 + $0x28] sm:$0xf]
        %v1117 = vld [vmem:[%s1105 + $0x2c] sm:$0xf]
        %v1118 = vld [vmem:[%s1105 + $0x30] sm:$0xf]
        %v1119 = vld [vmem:[%s1105 + $0x34] sm:$0xf]
        %v1120 = vld [vmem:[%s1105 + $0x38] sm:$0xf]
        %v1121 = vld [vmem:[%s1105 + $0x3c] sm:$0xf]
        %v1122 = vld [vmem:[%s1105 + $0x40] sm:$0xf]
        %v1123 = vld [vmem:[%s1105 + $0x44] sm:$0xf]
        %v1125 = vunpack.c.l.b16 %v1104
        %v1126 = vunpack.c.h.b16 %v1104
        %v1127 = vpack.c.b16 %v901, %v1125
        %v1128 = vpack.c.b16 %v902, %v1126
        %v1129 = vrot.slane %v1127, 1
        %v1130 = vrot.slane %v907, 1
        %v1131 = vsel %vm707, %v1129, %v1130
        %v1132 = vrot.slane %v1128, 1
        %v1133 = vrot.slane %v908, 1
        %v1134 = vsel %vm707, %v1132, %v1133
        %v1154 = vunpack.c.l.b16 %v1106
        %v1155 = vunpack.c.l.b16 %v1107
        %v1156 = vunpack.c.l.b16 %v1108
        %v1157 = vunpack.c.l.b16 %v1109
        %v1158 = vunpack.c.l.b16 %v1110
        %v1159 = vunpack.c.l.b16 %v1111
        %v1160 = vunpack.c.l.b16 %v1112
        %v1161 = vunpack.c.l.b16 %v1113
        %v1162 = vunpack.c.l.b16 %v1114
        %v1163 = vunpack.c.l.b16 %v1115
        %v1164 = vunpack.c.l.b16 %v1116
        %v1165 = vunpack.c.l.b16 %v1117
        %v1166 = vunpack.c.l.b16 %v1118
        %v1167 = vunpack.c.l.b16 %v1119
        %v1168 = vunpack.c.l.b16 %v1120
        %v1169 = vunpack.c.l.b16 %v1121
        %v1170 = vunpack.c.l.b16 %v1122
        %v1171 = vunpack.c.l.b16 %v1123
        %v1172 = vpack.c.b16 %v1155, %v1154
        %v1173 = vpack.c.b16 %v1157, %v1156
        %v1174 = vpack.c.b16 %v1159, %v1158
        %v1175 = vpack.c.b16 %v1161, %v1160
        %v1176 = vpack.c.b16 %v1163, %v1162
        %v1177 = vpack.c.b16 %v1165, %v1164
        %v1178 = vpack.c.b16 %v1167, %v1166
        %v1179 = vpack.c.b16 %v1169, %v1168
        %v1180 = vpack.c.b16 %v1171, %v1170
        %v1191 = vsel %vm565, %v1134, 0
        %1193 = vmatpush.bf16.msra.mxu0 %v1179
        %1194 = vmatpush.bf16.msra.mxu0 %v1178
        %1195 = vmatpush.bf16.msra.mxu0 %v1177
        %1196 = vmatpush.bf16.msra.mxu0 %v1176
        %1197 = vmatpush.bf16.msra.mxu0 %v1175
        %1198 = vmatpush.bf16.msra.mxu0 %v1174
        %1199 = vmatpush.bf16.msra.mxu0 %v1173
        %1200 = vmatpush.bf16.msra.mxu0 %v1172
        %1201 = vmatmul.bf16.gmra.mxu0 %v1131
        %v1202 = vpop.f32.mrf.mxu0
        %v1203 = vadd.f32 0.0, %v1202
        %v1204 = vpop.f32.mrf.mxu0
        %v1205 = vadd.f32 0.0, %v1204
        %1206 = vdwg.mxu0
        %1207 = vmatpush.bf16.msra.mxu0 0
        %1208 = vmatpush.bf16.msra.mxu0 0
        %1209 = vmatpush.bf16.msra.mxu0 0
        %1210 = vmatpush.bf16.msra.mxu0 0
        %1211 = vmatpush.bf16.msra.mxu0 0
        %1212 = vmatpush.bf16.msra.mxu0 0
        %1213 = vmatpush.bf16.msra.mxu0 0
        %1214 = vmatpush.bf16.msra.mxu0 %v1180
        %1215 = vmatmul.bf16.gmra.mxu0 %v1191
        %v1216 = vpop.f32.mrf.mxu0
        %v1217 = vadd.f32 %v1203, %v1216
        %v1218 = vpop.f32.mrf.mxu0
        %v1219 = vadd.f32 %v1205, %v1218
        %1220 = vdwg.mxu0
        %v1221 = vadd.f32 %v1100, %v1217
        %v1222 = vadd.f32 %v1102, %v1219
        %v1223 = vld [vmem:[%s5] sm:$0x1]
        %v1225 = vperm.slane %v1223, 0
        %v1227 = vmul.f32 %v1221, %v1225
        %v1228 = vmul.f32 %v1222, %v1225
        %v1229 = vld [vmem:[%s6] sm:$0x1]
        %v1231 = vperm.slane %v1229, 0
        %v1233 = vadd.f32 %v1227, %v1231
        %v1234 = vadd.f32 %v1228, %v1231
        %v1235 = vunpack.c.l.bf16 %v375
        %v1236 = vunpack.c.l.bf16 %v376
        %v1237 = vadd.f32 %v1233, %v1235
        %v1238 = vadd.f32 %v1234, %v1236
        %v1239 = vmax.f32 %v1237, 0.0
        %v1240 = vmax.f32 %v1238, 0.0
        %1241 = vst [vmem:[%s331] sm:$0xff] %v1239
        %1242 = vst [vmem:[%s331 + $0x8] sm:$0xff] %v1240
        %s1243 = sand.u32 %s185, 1
        %s1244 = scalar_lea.sflag [#allocation5], %s1243
        %s1245 = sand.u32 %s185, 1
        %s1246 = smul.addr %s1245, 16
        %s1247 = scalar_lea.vmem [#allocation9], %s1246
        // Predicated region
        $region61: #{tpu_custom_call.1} parent=47 // pred_check
          %p1248 = pneg %p195
        $region62: #{tpu_custom_call.1} parent=47 // pred_check_branch
          %1250 = sbr.rel (%p1248) target = $region64
        $region63: #{tpu_custom_call.1} parent=47 // pred_region
          %1252 = vsyncadd %s1244, 0
          %s1253 = smul.addr %s25, 2
          %s1254 = smul.addr %s1253, 8
          %s1255 = scalar_lea.hbm %s7, %s1254
          %s1256 = sshll.u32 %s1247, 4
          %s1257 = int_to_ptr.vmem [resolvable:$true] %s1256
          %s1258 = sshll.u32 %s1255, 4
          %s1259 = int_to_ptr.hbm [resolvable:$true] %s1258
          %1264 = dma.vmem_to_hbm [thread:$0]  %s1257, 256, %s1259, %s1244, 128, 128, 8
        $region64: #{tpu_custom_call.1} parent=47 // pred_fallthru
          _
      $region48: #{tpu_custom_call.1} parent=5 // pred_fallthru
        _
      %p1265 = scmp.le.s32.totalorder 2, %s20
      // Predicated region
      $region65: #{tpu_custom_call.1} parent=5 // pred_check
        %p1266 = pneg %p1265
      $region66: #{tpu_custom_call.1} parent=5 // pred_check_branch
        %1268 = sbr.rel (%p1266) target = $region68
      $region67: #{tpu_custom_call.1} parent=5 // pred_region
        %s1269 = ssub.s32 %s20, 2
        // Predicated region
        $region69: #{tpu_custom_call.1} parent=67 // pred_check
          %p1270 = pneg %p201
        $region70: #{tpu_custom_call.1} parent=67 // pred_check_branch
          %1272 = sbr.rel (%p1270) target = $region72
        $region71: #{tpu_custom_call.1} parent=67 // pred_region
          %s1273 = sand.u32 %s186, 1
          %s1274 = scalar_lea.sflag [#allocation5], %s1273
          %s1275 = sand.u32 %s186, 1
          %s1276 = smul.addr %s1275, 16
          %s1277 = scalar_lea.vmem [#allocation9], %s1276
          %1279 = dma.done %s1274, 256
        $region72: #{tpu_custom_call.1} parent=67 // pred_fallthru
          _
      $region68: #{tpu_custom_call.1} parent=5 // pred_fallthru
        _
    $region6: #{tpu_custom_call.1} parent=1 // loop_footer
      %s24 = sadd.s32 1, %s20
    $region7: #{tpu_custom_call.1} parent=1 // loop_footer_branch
      %19 = sbr.rel target = $region3
    $region8: #{tpu_custom_call.1} parent=1 // loop_exit
      _
    %1280 = vsyncpa [#allocation4], 1
    %s1281 = scalar_lea.sflag [#allocation4], 1
    %1282 = vsyncpa %s1281, 1
    %1283 = vsyncpa [#allocation7], 1
    %1284 = vsyncpa [#allocation5], 1
    %s1285 = scalar_lea.sflag [#allocation5], 1
    %1286 = vsyncpa %s1285, 1

</llo_original>
